<compile_context>
chip_gen: v7x
topology: tpu7x:2x2x1
jax: 0.10.0
libtpu: 0.0.40
codegen_flags: <defaults>
</compile_context>

<pallas_src>
import numpy as np
import jax
import jax.numpy as jnp
from jax.experimental import pallas as pl
from jax.experimental.pallas import tpu as pltpu


# ----------------------------- Pallas kernels -----------------------------

def _lstm_kernel(x_ref, len_ref, wih_ref, whh_ref, b_ref, hout_ref):
    """Unidirectional single-layer LSTM; returns the last valid hidden state.

    x_ref:    [T*B, E]  bf16  time-major flattened embeddings
    len_ref:  [B, 1]    int32 answer lengths (pack_padded_sequence masking)
    wih_ref:  [E, 4H]   bf16  fused input weights   (gate order i|f|g|o)
    whh_ref:  [H, 4H]   bf16  fused recurrent weights
    b_ref:    [1, 4H]   f32   fused bias (b_ih + b_hh)
    hout_ref: [B, H]    f32   hidden state at step alengths[b]-1
    """
    TB = x_ref.shape[0]
    B, Hh = hout_ref.shape
    T = TB // B

    # Hoisted input projection + bias: ONE [T*B, E] x [E, 4H] MXU matmul, off
    # the recurrence critical path; result is tiny and stays register-resident.
    xg = jnp.dot(x_ref[...], wih_ref[...],
                 preferred_element_type=jnp.float32) + b_ref[...]   # [T*B, 4H]

    lens = len_ref[...]                 # [B, 1] int32, loaded once
    whh = whh_ref[...]                  # [H, 4H] bf16, loaded once

    h = jnp.zeros((B, Hh), jnp.float32)
    c = jnp.zeros((B, Hh), jnp.float32)

    # T is static and small -> fully unrolled loop (max LLO scheduler
    # visibility).  One 128-lane matmul per step; gates sliced at static
    # 32-lane offsets.  Elementwise math stays f32 (v5e-friendly).
    for t in range(T):
        g = xg[t * B:(t + 1) * B, :] + jnp.dot(
            h.astype(jnp.bfloat16), whh, preferred_element_type=jnp.float32)
        i_g = jax.nn.sigmoid(g[:, 0 * Hh:1 * Hh])
        f_g = jax.nn.sigmoid(g[:, 1 * Hh:2 * Hh])
        g_g = jnp.tanh(g[:, 2 * Hh:3 * Hh])
        o_g = jax.nn.sigmoid(g[:, 3 * Hh:4 * Hh])
        c_new = f_g * c + i_g * g_g
        h_new = o_g * jnp.tanh(c_new)
        # Masked update == pack_padded_sequence semantics (state frozen past
        # each sequence length; alengths is assumed >= 1).
        keep = t < lens                  # [B, 1] bool
        h = jnp.where(keep, h_new, h)
        c = jnp.where(keep, c_new, c)

    hout_ref[...] = h


def _cnn_fc_up_kernel(p_ref, wc_ref, bc_ref, h_ref, wf_ref, bf_ref, up_ref,
                      o_ref):
    """Fused per batch element: patchify-conv (ResNet stand-in) + ReLU,
    modulation by the answer hidden state, 1x1-conv `fc`, and align_corners
    bilinear upsample.  Output is emitted lane-dense as [K2, H*W].

    p_ref:  [1, K, P]    bf16  image patches, contraction-major (no zero pad)
    wc_ref: [Hh, K]      bf16  conv weight (ResNet stand-in)
    bc_ref: [Hh, 1]      f32
    h_ref:  [1, Hh, 1]   f32   LSTM last hidden state for this batch element
    wf_ref: [K2, Hh]     bf16  1x1-conv (`fc`) weight
    bf_ref: [K2, 1]      f32
    up_ref: [P, H*W]     f32   kron(A_h, A_w)^T bilinear factor (host const)
    o_ref:  [1, K2, H*W] f32
    """
    featT = jnp.dot(wc_ref[...], p_ref[0],
                    preferred_element_type=jnp.float32)              # [Hh, P]
    featT = jnp.maximum(featT + bc_ref[...], 0.0)                    # ReLU
    modT = (featT * h_ref[0]).astype(jnp.bfloat16)                   # modulate
    fcT = jnp.dot(wf_ref[...], modT,
                  preferred_element_type=jnp.float32) + bf_ref[...]  # [K2, P]
    # Bilinear upsample as one matmul -> lane-dense [K2, 256] output, with no
    # in-kernel reshape/transpose.
    o_ref[0] = jnp.dot(fcT, up_ref[...], preferred_element_type=jnp.float32)


# ----------------------------- pallas_call wrappers -----------------------------

def lstm_last_hidden(x_flat, lens, w_ih, w_hh, b):
    TB, E = x_flat.shape
    B = lens.shape[0]
    H4 = w_hh.shape[1]
    Hh = H4 // 4
    return pl.pallas_call(
        _lstm_kernel,
        out_shape=jax.ShapeDtypeStruct((B, Hh), jnp.float32),
        grid=(1,),
        in_specs=[pl.BlockSpec((TB, E), lambda i: (0, 0)),
                  pl.BlockSpec((B, 1), lambda i: (0, 0)),
                  pl.BlockSpec((E, H4), lambda i: (0, 0)),
                  pl.BlockSpec((Hh, H4), lambda i: (0, 0)),
                  pl.BlockSpec((1, H4), lambda i: (0, 0))],
        out_specs=pl.BlockSpec((B, Hh), lambda i: (0, 0)),
    )(x_flat, lens, w_ih, w_hh, b)


def cnn_fc_upsample(patches_t, w_conv, b_conv, h, w_fc, b_fc, up):
    B, K, P = patches_t.shape
    Hh = w_conv.shape[0]
    K2 = w_fc.shape[0]
    HW = up.shape[1]
    return pl.pallas_call(
        _cnn_fc_up_kernel,
        out_shape=jax.ShapeDtypeStruct((B, K2, HW), jnp.float32),
        grid=(B,),
        in_specs=[pl.BlockSpec((1, K, P), lambda b: (b, 0, 0)),
                  pl.BlockSpec((Hh, K), lambda b: (0, 0)),
                  pl.BlockSpec((Hh, 1), lambda b: (0, 0)),
                  pl.BlockSpec((1, Hh, 1), lambda b: (b, 0, 0)),
                  pl.BlockSpec((K2, Hh), lambda b: (0, 0)),
                  pl.BlockSpec((K2, 1), lambda b: (0, 0)),
                  pl.BlockSpec((P, HW), lambda b: (0, 0))],
        out_specs=pl.BlockSpec((1, K2, HW), lambda b: (b, 0, 0)),
        compiler_params=pltpu.CompilerParams(
            dimension_semantics=("parallel",)),   # v7x: split batch over 2 TCs
    )(patches_t, w_conv, b_conv, h, w_fc, b_fc, up)


# ----------------------------- host-side helpers -----------------------------

def _bilinear_matrix_np(out_size, in_size):
    # align_corners=True interpolation matrix (as used by F.upsample_bilinear),
    # computed once on the host with numpy.
    A = np.zeros((out_size, in_size), np.float32)
    if out_size == 1:
        A[0, 0] = 1.0
        return A
    if in_size == 1:
        A[:, 0] = 1.0
        return A
    src = np.arange(out_size, dtype=np.float64) * (in_size - 1) / (out_size - 1)
    i0 = np.floor(src).astype(np.int64)
    i1 = np.minimum(i0 + 1, in_size - 1)
    frac = (src - i0).astype(np.float32)
    for r in range(out_size):
        A[r, i0[r]] += 1.0 - frac[r]
        A[r, i1[r]] += frac[r]
    return A


def _bilinear_kron_t_np(H, W, Hp, Wp):
    # kron(A_h, A_w)^T : [Hp*Wp, H*W].  Tiny at these shapes (16 x 256) and
    # yields a lane-dense single-matmul upsample epilogue inside the fused
    # kernel.  (Use the separable form for large images.)
    a_h = _bilinear_matrix_np(H, Hp)
    a_w = _bilinear_matrix_np(W, Wp)
    return np.ascontiguousarray(np.kron(a_h, a_w).T)


def init_params(key, vocab_size, vocab_embed_size, hidden_size,
                patch=4, in_ch=3, num_classes=2):
    ks = jax.random.split(key, 8)
    E, Hh = vocab_embed_size, hidden_size
    K = in_ch * patch * patch
    return {
        "embed": jax.random.normal(ks[0], (vocab_size, E), jnp.float32) * 0.1,
        # Fused-gate, lane-dense LSTM weights (i|f|g|o along 4H = 128 lanes);
        # MXU operands stored in bf16 ONCE (no per-forward casts).
        "w_ih": (jax.random.normal(ks[1], (E, 4 * Hh), jnp.float32) * 0.1
                 ).astype(jnp.bfloat16),
        "w_hh": (jax.random.normal(ks[2], (Hh, 4 * Hh), jnp.float32) * 0.1
                 ).astype(jnp.bfloat16),
        "b_lstm": jax.random.normal(ks[3], (1, 4 * Hh), jnp.float32) * 0.1,
        # Conv / fc weights stored output-major (transposed) so the fused
        # kernel needs no in-kernel transposes; no 48->128 zero padding.
        "w_conv": (jax.random.normal(ks[4], (Hh, K), jnp.float32) * 0.1
                   ).astype(jnp.bfloat16),
        "b_conv": jax.random.normal(ks[5], (Hh, 1), jnp.float32) * 0.1,
        "w_fc": (jax.random.normal(ks[6], (num_classes, Hh), jnp.float32) * 0.1
                 ).astype(jnp.bfloat16),
        "b_fc": jax.random.normal(ks[7], (num_classes, 1), jnp.float32) * 0.1,
    }


def seg_model_forward(params, images, answers, alengths, up_kron_t, patch=4):
    B, Cin, H, W = images.shape
    Hp, Wp = H // patch, W // patch
    P = Hp * Wp
    K = Cin * patch * patch
    Hh = params["w_hh"].shape[0]
    K2 = params["w_fc"].shape[0]

    # --- encoder_rnn: embedding lookup (XLA glue) + LSTM last hidden (Pallas) ---
    emb = params["embed"][answers]                                   # [B, T, E]
    T = emb.shape[1]
    x_flat = jnp.transpose(emb, (1, 0, 2)).reshape(T * B, -1).astype(jnp.bfloat16)
    lens = alengths.astype(jnp.int32).reshape(B, 1)
    h_last = lstm_last_hidden(x_flat, lens, params["w_ih"], params["w_hh"],
                              params["b_lstm"])                      # [B, Hh]

    # --- encoder_cnn.resnet stand-in + modulation + fc + bilinear upsample ---
    # Single fused Pallas call; output lane-dense as [B, K2, H*W].
    x = images.reshape(B, Cin, Hp, patch, Wp, patch)
    patches_t = jnp.transpose(x, (0, 1, 3, 5, 2, 4)).reshape(B, K, P)
    patches_t = patches_t.astype(jnp.bfloat16)
    out = cnn_fc_upsample(patches_t, params["w_conv"], params["b_conv"],
                          h_last.reshape(B, Hh, 1),
                          params["w_fc"], params["b_fc"], up_kron_t)  # [B,K2,H*W]
    return out.reshape(B, K2, H, W)


# ----------------------------- main -----------------------------

if __name__ == "__main__":
    # Small, forward-consistent shapes.
    B, Cin, H, W = 2, 3, 16, 16
    vocab_size, max_len = 50, 8
    hidden_size, vocab_embed_size = 32, 16
    patch = 4

    key = jax.random.PRNGKey(0)
    k_img, k_ans, k_param = jax.random.split(key, 3)

    images = jax.random.normal(k_img, (B, Cin, H, W), jnp.float32)
    answers = jax.random.randint(k_ans, (B, max_len), 0, vocab_size)
    alengths = jnp.array([max_len, 5], dtype=jnp.int32)

    params = init_params(k_param, vocab_size, vocab_embed_size, hidden_size,
                         patch=patch, in_ch=Cin)

    # Bilinear interpolation factor: host constant, computed once.
    up_kron_t = jnp.asarray(
        _bilinear_kron_t_np(H, W, H // patch, W // patch))           # [P, H*W]

    result = seg_model_forward(params, images, answers, alengths, up_kron_t,
                               patch=patch)
    jax.block_until_ready(result)
    assert result.shape == (B, 2, H, W), result.shape
    print("KERNEL_OK")
</pallas_src>

<mosaic_0001>
module attributes {stable_mosaic.version = 11 : i64} {
  func.func @_lstm_kernel(%arg0: i32, %arg1: memref<16x16xbf16, #tpu.memory_space<vmem>>, %arg2: memref<2x1xi32, #tpu.memory_space<vmem>>, %arg3: memref<16x128xbf16, #tpu.memory_space<vmem>>, %arg4: memref<32x128xbf16, #tpu.memory_space<vmem>>, %arg5: memref<1x128xf32, #tpu.memory_space<vmem>>, %arg6: memref<2x32xf32, #tpu.memory_space<vmem>>) attributes {dimension_semantics = [#tpu.dimension_semantics<arbitrary>], iteration_bounds = array<i64: 1>, scalar_prefetch = 0 : i64, scratch_operands = 0 : i64, tpu.core_type = #tpu.core_type<tc>, window_params = [{pipeline_mode = #tpu.pipeline_mode<synchronous>, transform_indices = @transform_0, window_bounds = array<i64: 16, 16>}, {pipeline_mode = #tpu.pipeline_mode<synchronous>, transform_indices = @transform_1, window_bounds = array<i64: 2, 1>}, {pipeline_mode = #tpu.pipeline_mode<synchronous>, transform_indices = @transform_2, window_bounds = array<i64: 16, 128>}, {pipeline_mode = #tpu.pipeline_mode<synchronous>, transform_indices = @transform_3, window_bounds = array<i64: 32, 128>}, {pipeline_mode = #tpu.pipeline_mode<synchronous>, transform_indices = @transform_4, window_bounds = array<i64: 1, 128>}, {pipeline_mode = #tpu.pipeline_mode<synchronous>, transform_indices = @transform_5, window_bounds = array<i64: 2, 32>}]} {
    %c0 = arith.constant 0 : index
    %c0_0 = arith.constant 0 : index
    %0 = vector.load %arg1[%c0, %c0_0] : memref<16x16xbf16, #tpu.memory_space<vmem>>, vector<16x16xbf16>
    %c0_1 = arith.constant 0 : index
    %c0_2 = arith.constant 0 : index
    %1 = vector.load %arg3[%c0_1, %c0_2] : memref<16x128xbf16, #tpu.memory_space<vmem>>, vector<16x128xbf16>
    %cst = arith.constant dense<0.000000e+00> : vector<16x128xf32>
    %2 = tpu.matmul %0, %1, %cst {dimension_numbers = #tpu.dot_dimension_numbers<[1], [0], [0], [1], [0, 0, 1, 1], [], []>} : vector<16x16xbf16>, vector<16x128xbf16>, vector<16x128xf32> -> vector<16x128xf32>
    %c0_3 = arith.constant 0 : index
    %c0_4 = arith.constant 0 : index
    %3 = vector.load %arg5[%c0_3, %c0_4] : memref<1x128xf32, #tpu.memory_space<vmem>>, vector<1x128xf32>
    %4 = vector.broadcast %3 : vector<1x128xf32> to vector<16x128xf32>
    %5 = arith.addf %2, %4 : vector<16x128xf32>
    %c0_5 = arith.constant 0 : index
    %c0_6 = arith.constant 0 : index
    %6 = vector.load %arg2[%c0_5, %c0_6] : memref<2x1xi32, #tpu.memory_space<vmem>>, vector<2x1xi32>
    %c0_7 = arith.constant 0 : index
    %c0_8 = arith.constant 0 : index
    %7 = vector.load %arg4[%c0_7, %c0_8] : memref<32x128xbf16, #tpu.memory_space<vmem>>, vector<32x128xbf16>
    %cst_9 = arith.constant 0.000000e+00 : f32
    %8 = vector.broadcast %cst_9 : f32 to vector<2x32xf32>
    %cst_10 = arith.constant 0.000000e+00 : f32
    %9 = vector.broadcast %cst_10 : f32 to vector<2x32xf32>
    %10 = vector.extract_strided_slice %5 {offsets = [0, 0], sizes = [2, 128], strides = [1, 1]} : vector<16x128xf32> to vector<2x128xf32>
    %11 = arith.truncf %8 : vector<2x32xf32> to vector<2x32xbf16>
    %cst_11 = arith.constant dense<0.000000e+00> : vector<2x128xf32>
    %12 = tpu.matmul %11, %7, %cst_11 {dimension_numbers = #tpu.dot_dimension_numbers<[1], [0], [0], [1], [0, 0, 1, 1], [], []>} : vector<2x32xbf16>, vector<32x128xbf16>, vector<2x128xf32> -> vector<2x128xf32>
    %13 = arith.addf %10, %12 : vector<2x128xf32>
    %14 = vector.extract_strided_slice %13 {offsets = [0, 0], sizes = [2, 32], strides = [1, 1]} : vector<2x128xf32> to vector<2x32xf32>
    %15 = arith.negf %14 : vector<2x32xf32>
    %16 = math.exp %15 : vector<2x32xf32>
    %cst_12 = arith.constant 1.000000e+00 : f32
    %17 = vector.broadcast %cst_12 : f32 to vector<2x32xf32>
    %18 = arith.addf %17, %16 : vector<2x32xf32>
    %19 = arith.divf %17, %18 : vector<2x32xf32>
    %20 = vector.extract_strided_slice %13 {offsets = [0, 32], sizes = [2, 32], strides = [1, 1]} : vector<2x128xf32> to vector<2x32xf32>
    %21 = arith.negf %20 : vector<2x32xf32>
    %22 = math.exp %21 : vector<2x32xf32>
    %cst_13 = arith.constant 1.000000e+00 : f32
    %23 = vector.broadcast %cst_13 : f32 to vector<2x32xf32>
    %24 = arith.addf %23, %22 : vector<2x32xf32>
    %25 = arith.divf %23, %24 : vector<2x32xf32>
    %26 = vector.extract_strided_slice %13 {offsets = [0, 64], sizes = [2, 32], strides = [1, 1]} : vector<2x128xf32> to vector<2x32xf32>
    %27 = math.tanh %26 : vector<2x32xf32>
    %28 = vector.extract_strided_slice %13 {offsets = [0, 96], sizes = [2, 32], strides = [1, 1]} : vector<2x128xf32> to vector<2x32xf32>
    %29 = arith.negf %28 : vector<2x32xf32>
    %30 = math.exp %29 : vector<2x32xf32>
    %cst_14 = arith.constant 1.000000e+00 : f32
    %31 = vector.broadcast %cst_14 : f32 to vector<2x32xf32>
    %32 = arith.addf %31, %30 : vector<2x32xf32>
    %33 = arith.divf %31, %32 : vector<2x32xf32>
    %34 = arith.mulf %25, %9 : vector<2x32xf32>
    %35 = arith.mulf %19, %27 : vector<2x32xf32>
    %36 = arith.addf %34, %35 : vector<2x32xf32>
    %37 = math.tanh %36 : vector<2x32xf32>
    %38 = arith.mulf %33, %37 : vector<2x32xf32>
    %c0_i32 = arith.constant 0 : i32
    %39 = vector.broadcast %c0_i32 : i32 to vector<2x1xi32>
    %40 = arith.cmpi sgt, %6, %39 : vector<2x1xi32>
    %41 = vector.shape_cast %40 : vector<2x1xi1> to vector<2x1xi1>
    %42 = vector.broadcast %41 : vector<2x1xi1> to vector<2x32xi1>
    %43 = arith.select %42, %38, %8 : vector<2x32xi1>, vector<2x32xf32>
    %44 = vector.shape_cast %40 : vector<2x1xi1> to vector<2x1xi1>
    %45 = vector.broadcast %44 : vector<2x1xi1> to vector<2x32xi1>
    %46 = arith.select %45, %36, %9 : vector<2x32xi1>, vector<2x32xf32>
    %47 = vector.extract_strided_slice %5 {offsets = [2, 0], sizes = [2, 128], strides = [1, 1]} : vector<16x128xf32> to vector<2x128xf32>
    %48 = arith.truncf %43 : vector<2x32xf32> to vector<2x32xbf16>
    %cst_15 = arith.constant dense<0.000000e+00> : vector<2x128xf32>
    %49 = tpu.matmul %48, %7, %cst_15 {dimension_numbers = #tpu.dot_dimension_numbers<[1], [0], [0], [1], [0, 0, 1, 1], [], []>} : vector<2x32xbf16>, vector<32x128xbf16>, vector<2x128xf32> -> vector<2x128xf32>
    %50 = arith.addf %47, %49 : vector<2x128xf32>
    %51 = vector.extract_strided_slice %50 {offsets = [0, 0], sizes = [2, 32], strides = [1, 1]} : vector<2x128xf32> to vector<2x32xf32>
    %52 = arith.negf %51 : vector<2x32xf32>
    %53 = math.exp %52 : vector<2x32xf32>
    %cst_16 = arith.constant 1.000000e+00 : f32
    %54 = vector.broadcast %cst_16 : f32 to vector<2x32xf32>
    %55 = arith.addf %54, %53 : vector<2x32xf32>
    %56 = arith.divf %54, %55 : vector<2x32xf32>
    %57 = vector.extract_strided_slice %50 {offsets = [0, 32], sizes = [2, 32], strides = [1, 1]} : vector<2x128xf32> to vector<2x32xf32>
    %58 = arith.negf %57 : vector<2x32xf32>
    %59 = math.exp %58 : vector<2x32xf32>
    %cst_17 = arith.constant 1.000000e+00 : f32
    %60 = vector.broadcast %cst_17 : f32 to vector<2x32xf32>
    %61 = arith.addf %60, %59 : vector<2x32xf32>
    %62 = arith.divf %60, %61 : vector<2x32xf32>
    %63 = vector.extract_strided_slice %50 {offsets = [0, 64], sizes = [2, 32], strides = [1, 1]} : vector<2x128xf32> to vector<2x32xf32>
    %64 = math.tanh %63 : vector<2x32xf32>
    %65 = vector.extract_strided_slice %50 {offsets = [0, 96], sizes = [2, 32], strides = [1, 1]} : vector<2x128xf32> to vector<2x32xf32>
    %66 = arith.negf %65 : vector<2x32xf32>
    %67 = math.exp %66 : vector<2x32xf32>
    %cst_18 = arith.constant 1.000000e+00 : f32
    %68 = vector.broadcast %cst_18 : f32 to vector<2x32xf32>
    %69 = arith.addf %68, %67 : vector<2x32xf32>
    %70 = arith.divf %68, %69 : vector<2x32xf32>
    %71 = arith.mulf %62, %46 : vector<2x32xf32>
    %72 = arith.mulf %56, %64 : vector<2x32xf32>
    %73 = arith.addf %71, %72 : vector<2x32xf32>
    %74 = math.tanh %73 : vector<2x32xf32>
    %75 = arith.mulf %70, %74 : vector<2x32xf32>
    %c1_i32 = arith.constant 1 : i32
    %76 = vector.broadcast %c1_i32 : i32 to vector<2x1xi32>
    %77 = arith.cmpi sgt, %6, %76 : vector<2x1xi32>
    %78 = vector.shape_cast %77 : vector<2x1xi1> to vector<2x1xi1>
    %79 = vector.broadcast %78 : vector<2x1xi1> to vector<2x32xi1>
    %80 = arith.select %79, %75, %43 : vector<2x32xi1>, vector<2x32xf32>
    %81 = vector.shape_cast %77 : vector<2x1xi1> to vector<2x1xi1>
    %82 = vector.broadcast %81 : vector<2x1xi1> to vector<2x32xi1>
    %83 = arith.select %82, %73, %46 : vector<2x32xi1>, vector<2x32xf32>
    %84 = vector.extract_strided_slice %5 {offsets = [4, 0], sizes = [2, 128], strides = [1, 1]} : vector<16x128xf32> to vector<2x128xf32>
    %85 = arith.truncf %80 : vector<2x32xf32> to vector<2x32xbf16>
    %cst_19 = arith.constant dense<0.000000e+00> : vector<2x128xf32>
    %86 = tpu.matmul %85, %7, %cst_19 {dimension_numbers = #tpu.dot_dimension_numbers<[1], [0], [0], [1], [0, 0, 1, 1], [], []>} : vector<2x32xbf16>, vector<32x128xbf16>, vector<2x128xf32> -> vector<2x128xf32>
    %87 = arith.addf %84, %86 : vector<2x128xf32>
    %88 = vector.extract_strided_slice %87 {offsets = [0, 0], sizes = [2, 32], strides = [1, 1]} : vector<2x128xf32> to vector<2x32xf32>
    %89 = arith.negf %88 : vector<2x32xf32>
    %90 = math.exp %89 : vector<2x32xf32>
    %cst_20 = arith.constant 1.000000e+00 : f32
    %91 = vector.broadcast %cst_20 : f32 to vector<2x32xf32>
    %92 = arith.addf %91, %90 : vector<2x32xf32>
    %93 = arith.divf %91, %92 : vector<2x32xf32>
    %94 = vector.extract_strided_slice %87 {offsets = [0, 32], sizes = [2, 32], strides = [1, 1]} : vector<2x128xf32> to vector<2x32xf32>
    %95 = arith.negf %94 : vector<2x32xf32>
    %96 = math.exp %95 : vector<2x32xf32>
    %cst_21 = arith.constant 1.000000e+00 : f32
    %97 = vector.broadcast %cst_21 : f32 to vector<2x32xf32>
    %98 = arith.addf %97, %96 : vector<2x32xf32>
    %99 = arith.divf %97, %98 : vector<2x32xf32>
    %100 = vector.extract_strided_slice %87 {offsets = [0, 64], sizes = [2, 32], strides = [1, 1]} : vector<2x128xf32> to vector<2x32xf32>
    %101 = math.tanh %100 : vector<2x32xf32>
    %102 = vector.extract_strided_slice %87 {offsets = [0, 96], sizes = [2, 32], strides = [1, 1]} : vector<2x128xf32> to vector<2x32xf32>
    %103 = arith.negf %102 : vector<2x32xf32>
    %104 = math.exp %103 : vector<2x32xf32>
    %cst_22 = arith.constant 1.000000e+00 : f32
    %105 = vector.broadcast %cst_22 : f32 to vector<2x32xf32>
    %106 = arith.addf %105, %104 : vector<2x32xf32>
    %107 = arith.divf %105, %106 : vector<2x32xf32>
    %108 = arith.mulf %99, %83 : vector<2x32xf32>
    %109 = arith.mulf %93, %101 : vector<2x32xf32>
    %110 = arith.addf %108, %109 : vector<2x32xf32>
    %111 = math.tanh %110 : vector<2x32xf32>
    %112 = arith.mulf %107, %111 : vector<2x32xf32>
    %c2_i32 = arith.constant 2 : i32
    %113 = vector.broadcast %c2_i32 : i32 to vector<2x1xi32>
    %114 = arith.cmpi sgt, %6, %113 : vector<2x1xi32>
    %115 = vector.shape_cast %114 : vector<2x1xi1> to vector<2x1xi1>
    %116 = vector.broadcast %115 : vector<2x1xi1> to vector<2x32xi1>
    %117 = arith.select %116, %112, %80 : vector<2x32xi1>, vector<2x32xf32>
    %118 = vector.shape_cast %114 : vector<2x1xi1> to vector<2x1xi1>
    %119 = vector.broadcast %118 : vector<2x1xi1> to vector<2x32xi1>
    %120 = arith.select %119, %110, %83 : vector<2x32xi1>, vector<2x32xf32>
    %121 = vector.extract_strided_slice %5 {offsets = [6, 0], sizes = [2, 128], strides = [1, 1]} : vector<16x128xf32> to vector<2x128xf32>
    %122 = arith.truncf %117 : vector<2x32xf32> to vector<2x32xbf16>
    %cst_23 = arith.constant dense<0.000000e+00> : vector<2x128xf32>
    %123 = tpu.matmul %122, %7, %cst_23 {dimension_numbers = #tpu.dot_dimension_numbers<[1], [0], [0], [1], [0, 0, 1, 1], [], []>} : vector<2x32xbf16>, vector<32x128xbf16>, vector<2x128xf32> -> vector<2x128xf32>
    %124 = arith.addf %121, %123 : vector<2x128xf32>
    %125 = vector.extract_strided_slice %124 {offsets = [0, 0], sizes = [2, 32], strides = [1, 1]} : vector<2x128xf32> to vector<2x32xf32>
    %126 = arith.negf %125 : vector<2x32xf32>
    %127 = math.exp %126 : vector<2x32xf32>
    %cst_24 = arith.constant 1.000000e+00 : f32
    %128 = vector.broadcast %cst_24 : f32 to vector<2x32xf32>
    %129 = arith.addf %128, %127 : vector<2x32xf32>
    %130 = arith.divf %128, %129 : vector<2x32xf32>
    %131 = vector.extract_strided_slice %124 {offsets = [0, 32], sizes = [2, 32], strides = [1, 1]} : vector<2x128xf32> to vector<2x32xf32>
    %132 = arith.negf %131 : vector<2x32xf32>
    %133 = math.exp %132 : vector<2x32xf32>
    %cst_25 = arith.constant 1.000000e+00 : f32
    %134 = vector.broadcast %cst_25 : f32 to vector<2x32xf32>
    %135 = arith.addf %134, %133 : vector<2x32xf32>
    %136 = arith.divf %134, %135 : vector<2x32xf32>
    %137 = vector.extract_strided_slice %124 {offsets = [0, 64], sizes = [2, 32], strides = [1, 1]} : vector<2x128xf32> to vector<2x32xf32>
    %138 = math.tanh %137 : vector<2x32xf32>
    %139 = vector.extract_strided_slice %124 {offsets = [0, 96], sizes = [2, 32], strides = [1, 1]} : vector<2x128xf32> to vector<2x32xf32>
    %140 = arith.negf %139 : vector<2x32xf32>
    %141 = math.exp %140 : vector<2x32xf32>
    %cst_26 = arith.constant 1.000000e+00 : f32
    %142 = vector.broadcast %cst_26 : f32 to vector<2x32xf32>
    %143 = arith.addf %142, %141 : vector<2x32xf32>
    %144 = arith.divf %142, %143 : vector<2x32xf32>
    %145 = arith.mulf %136, %120 : vector<2x32xf32>
    %146 = arith.mulf %130, %138 : vector<2x32xf32>
    %147 = arith.addf %145, %146 : vector<2x32xf32>
    %148 = math.tanh %147 : vector<2x32xf32>
    %149 = arith.mulf %144, %148 : vector<2x32xf32>
    %c3_i32 = arith.constant 3 : i32
    %150 = vector.broadcast %c3_i32 : i32 to vector<2x1xi32>
    %151 = arith.cmpi sgt, %6, %150 : vector<2x1xi32>
    %152 = vector.shape_cast %151 : vector<2x1xi1> to vector<2x1xi1>
    %153 = vector.broadcast %152 : vector<2x1xi1> to vector<2x32xi1>
    %154 = arith.select %153, %149, %117 : vector<2x32xi1>, vector<2x32xf32>
    %155 = vector.shape_cast %151 : vector<2x1xi1> to vector<2x1xi1>
    %156 = vector.broadcast %155 : vector<2x1xi1> to vector<2x32xi1>
    %157 = arith.select %156, %147, %120 : vector<2x32xi1>, vector<2x32xf32>
    %158 = vector.extract_strided_slice %5 {offsets = [8, 0], sizes = [2, 128], strides = [1, 1]} : vector<16x128xf32> to vector<2x128xf32>
    %159 = arith.truncf %154 : vector<2x32xf32> to vector<2x32xbf16>
    %cst_27 = arith.constant dense<0.000000e+00> : vector<2x128xf32>
    %160 = tpu.matmul %159, %7, %cst_27 {dimension_numbers = #tpu.dot_dimension_numbers<[1], [0], [0], [1], [0, 0, 1, 1], [], []>} : vector<2x32xbf16>, vector<32x128xbf16>, vector<2x128xf32> -> vector<2x128xf32>
    %161 = arith.addf %158, %160 : vector<2x128xf32>
    %162 = vector.extract_strided_slice %161 {offsets = [0, 0], sizes = [2, 32], strides = [1, 1]} : vector<2x128xf32> to vector<2x32xf32>
    %163 = arith.negf %162 : vector<2x32xf32>
    %164 = math.exp %163 : vector<2x32xf32>
    %cst_28 = arith.constant 1.000000e+00 : f32
    %165 = vector.broadcast %cst_28 : f32 to vector<2x32xf32>
    %166 = arith.addf %165, %164 : vector<2x32xf32>
    %167 = arith.divf %165, %166 : vector<2x32xf32>
    %168 = vector.extract_strided_slice %161 {offsets = [0, 32], sizes = [2, 32], strides = [1, 1]} : vector<2x128xf32> to vector<2x32xf32>
    %169 = arith.negf %168 : vector<2x32xf32>
    %170 = math.exp %169 : vector<2x32xf32>
    %cst_29 = arith.constant 1.000000e+00 : f32
    %171 = vector.broadcast %cst_29 : f32 to vector<2x32xf32>
    %172 = arith.addf %171, %170 : vector<2x32xf32>
    %173 = arith.divf %171, %172 : vector<2x32xf32>
    %174 = vector.extract_strided_slice %161 {offsets = [0, 64], sizes = [2, 32], strides = [1, 1]} : vector<2x128xf32> to vector<2x32xf32>
    %175 = math.tanh %174 : vector<2x32xf32>
    %176 = vector.extract_strided_slice %161 {offsets = [0, 96], sizes = [2, 32], strides = [1, 1]} : vector<2x128xf32> to vector<2x32xf32>
    %177 = arith.negf %176 : vector<2x32xf32>
    %178 = math.exp %177 : vector<2x32xf32>
    %cst_30 = arith.constant 1.000000e+00 : f32
    %179 = vector.broadcast %cst_30 : f32 to vector<2x32xf32>
    %180 = arith.addf %179, %178 : vector<2x32xf32>
    %181 = arith.divf %179, %180 : vector<2x32xf32>
    %182 = arith.mulf %173, %157 : vector<2x32xf32>
    %183 = arith.mulf %167, %175 : vector<2x32xf32>
    %184 = arith.addf %182, %183 : vector<2x32xf32>
    %185 = math.tanh %184 : vector<2x32xf32>
    %186 = arith.mulf %181, %185 : vector<2x32xf32>
    %c4_i32 = arith.constant 4 : i32
    %187 = vector.broadcast %c4_i32 : i32 to vector<2x1xi32>
    %188 = arith.cmpi sgt, %6, %187 : vector<2x1xi32>
    %189 = vector.shape_cast %188 : vector<2x1xi1> to vector<2x1xi1>
    %190 = vector.broadcast %189 : vector<2x1xi1> to vector<2x32xi1>
    %191 = arith.select %190, %186, %154 : vector<2x32xi1>, vector<2x32xf32>
    %192 = vector.shape_cast %188 : vector<2x1xi1> to vector<2x1xi1>
    %193 = vector.broadcast %192 : vector<2x1xi1> to vector<2x32xi1>
    %194 = arith.select %193, %184, %157 : vector<2x32xi1>, vector<2x32xf32>
    %195 = vector.extract_strided_slice %5 {offsets = [10, 0], sizes = [2, 128], strides = [1, 1]} : vector<16x128xf32> to vector<2x128xf32>
    %196 = arith.truncf %191 : vector<2x32xf32> to vector<2x32xbf16>
    %cst_31 = arith.constant dense<0.000000e+00> : vector<2x128xf32>
    %197 = tpu.matmul %196, %7, %cst_31 {dimension_numbers = #tpu.dot_dimension_numbers<[1], [0], [0], [1], [0, 0, 1, 1], [], []>} : vector<2x32xbf16>, vector<32x128xbf16>, vector<2x128xf32> -> vector<2x128xf32>
    %198 = arith.addf %195, %197 : vector<2x128xf32>
    %199 = vector.extract_strided_slice %198 {offsets = [0, 0], sizes = [2, 32], strides = [1, 1]} : vector<2x128xf32> to vector<2x32xf32>
    %200 = arith.negf %199 : vector<2x32xf32>
    %201 = math.exp %200 : vector<2x32xf32>
    %cst_32 = arith.constant 1.000000e+00 : f32
    %202 = vector.broadcast %cst_32 : f32 to vector<2x32xf32>
    %203 = arith.addf %202, %201 : vector<2x32xf32>
    %204 = arith.divf %202, %203 : vector<2x32xf32>
    %205 = vector.extract_strided_slice %198 {offsets = [0, 32], sizes = [2, 32], strides = [1, 1]} : vector<2x128xf32> to vector<2x32xf32>
    %206 = arith.negf %205 : vector<2x32xf32>
    %207 = math.exp %206 : vector<2x32xf32>
    %cst_33 = arith.constant 1.000000e+00 : f32
    %208 = vector.broadcast %cst_33 : f32 to vector<2x32xf32>
    %209 = arith.addf %208, %207 : vector<2x32xf32>
    %210 = arith.divf %208, %209 : vector<2x32xf32>
    %211 = vector.extract_strided_slice %198 {offsets = [0, 64], sizes = [2, 32], strides = [1, 1]} : vector<2x128xf32> to vector<2x32xf32>
    %212 = math.tanh %211 : vector<2x32xf32>
    %213 = vector.extract_strided_slice %198 {offsets = [0, 96], sizes = [2, 32], strides = [1, 1]} : vector<2x128xf32> to vector<2x32xf32>
    %214 = arith.negf %213 : vector<2x32xf32>
    %215 = math.exp %214 : vector<2x32xf32>
    %cst_34 = arith.constant 1.000000e+00 : f32
    %216 = vector.broadcast %cst_34 : f32 to vector<2x32xf32>
    %217 = arith.addf %216, %215 : vector<2x32xf32>
    %218 = arith.divf %216, %217 : vector<2x32xf32>
    %219 = arith.mulf %210, %194 : vector<2x32xf32>
    %220 = arith.mulf %204, %212 : vector<2x32xf32>
    %221 = arith.addf %219, %220 : vector<2x32xf32>
    %222 = math.tanh %221 : vector<2x32xf32>
    %223 = arith.mulf %218, %222 : vector<2x32xf32>
    %c5_i32 = arith.constant 5 : i32
    %224 = vector.broadcast %c5_i32 : i32 to vector<2x1xi32>
    %225 = arith.cmpi sgt, %6, %224 : vector<2x1xi32>
    %226 = vector.shape_cast %225 : vector<2x1xi1> to vector<2x1xi1>
    %227 = vector.broadcast %226 : vector<2x1xi1> to vector<2x32xi1>
    %228 = arith.select %227, %223, %191 : vector<2x32xi1>, vector<2x32xf32>
    %229 = vector.shape_cast %225 : vector<2x1xi1> to vector<2x1xi1>
    %230 = vector.broadcast %229 : vector<2x1xi1> to vector<2x32xi1>
    %231 = arith.select %230, %221, %194 : vector<2x32xi1>, vector<2x32xf32>
    %232 = vector.extract_strided_slice %5 {offsets = [12, 0], sizes = [2, 128], strides = [1, 1]} : vector<16x128xf32> to vector<2x128xf32>
    %233 = arith.truncf %228 : vector<2x32xf32> to vector<2x32xbf16>
    %cst_35 = arith.constant dense<0.000000e+00> : vector<2x128xf32>
    %234 = tpu.matmul %233, %7, %cst_35 {dimension_numbers = #tpu.dot_dimension_numbers<[1], [0], [0], [1], [0, 0, 1, 1], [], []>} : vector<2x32xbf16>, vector<32x128xbf16>, vector<2x128xf32> -> vector<2x128xf32>
    %235 = arith.addf %232, %234 : vector<2x128xf32>
    %236 = vector.extract_strided_slice %235 {offsets = [0, 0], sizes = [2, 32], strides = [1, 1]} : vector<2x128xf32> to vector<2x32xf32>
    %237 = arith.negf %236 : vector<2x32xf32>
    %238 = math.exp %237 : vector<2x32xf32>
    %cst_36 = arith.constant 1.000000e+00 : f32
    %239 = vector.broadcast %cst_36 : f32 to vector<2x32xf32>
    %240 = arith.addf %239, %238 : vector<2x32xf32>
    %241 = arith.divf %239, %240 : vector<2x32xf32>
    %242 = vector.extract_strided_slice %235 {offsets = [0, 32], sizes = [2, 32], strides = [1, 1]} : vector<2x128xf32> to vector<2x32xf32>
    %243 = arith.negf %242 : vector<2x32xf32>
    %244 = math.exp %243 : vector<2x32xf32>
    %cst_37 = arith.constant 1.000000e+00 : f32
    %245 = vector.broadcast %cst_37 : f32 to vector<2x32xf32>
    %246 = arith.addf %245, %244 : vector<2x32xf32>
    %247 = arith.divf %245, %246 : vector<2x32xf32>
    %248 = vector.extract_strided_slice %235 {offsets = [0, 64], sizes = [2, 32], strides = [1, 1]} : vector<2x128xf32> to vector<2x32xf32>
    %249 = math.tanh %248 : vector<2x32xf32>
    %250 = vector.extract_strided_slice %235 {offsets = [0, 96], sizes = [2, 32], strides = [1, 1]} : vector<2x128xf32> to vector<2x32xf32>
    %251 = arith.negf %250 : vector<2x32xf32>
    %252 = math.exp %251 : vector<2x32xf32>
    %cst_38 = arith.constant 1.000000e+00 : f32
    %253 = vector.broadcast %cst_38 : f32 to vector<2x32xf32>
    %254 = arith.addf %253, %252 : vector<2x32xf32>
    %255 = arith.divf %253, %254 : vector<2x32xf32>
    %256 = arith.mulf %247, %231 : vector<2x32xf32>
    %257 = arith.mulf %241, %249 : vector<2x32xf32>
    %258 = arith.addf %256, %257 : vector<2x32xf32>
    %259 = math.tanh %258 : vector<2x32xf32>
    %260 = arith.mulf %255, %259 : vector<2x32xf32>
    %c6_i32 = arith.constant 6 : i32
    %261 = vector.broadcast %c6_i32 : i32 to vector<2x1xi32>
    %262 = arith.cmpi sgt, %6, %261 : vector<2x1xi32>
    %263 = vector.shape_cast %262 : vector<2x1xi1> to vector<2x1xi1>
    %264 = vector.broadcast %263 : vector<2x1xi1> to vector<2x32xi1>
    %265 = arith.select %264, %260, %228 : vector<2x32xi1>, vector<2x32xf32>
    %266 = vector.shape_cast %262 : vector<2x1xi1> to vector<2x1xi1>
    %267 = vector.broadcast %266 : vector<2x1xi1> to vector<2x32xi1>
    %268 = arith.select %267, %258, %231 : vector<2x32xi1>, vector<2x32xf32>
    %269 = vector.extract_strided_slice %5 {offsets = [14, 0], sizes = [2, 128], strides = [1, 1]} : vector<16x128xf32> to vector<2x128xf32>
    %270 = arith.truncf %265 : vector<2x32xf32> to vector<2x32xbf16>
    %cst_39 = arith.constant dense<0.000000e+00> : vector<2x128xf32>
    %271 = tpu.matmul %270, %7, %cst_39 {dimension_numbers = #tpu.dot_dimension_numbers<[1], [0], [0], [1], [0, 0, 1, 1], [], []>} : vector<2x32xbf16>, vector<32x128xbf16>, vector<2x128xf32> -> vector<2x128xf32>
    %272 = arith.addf %269, %271 : vector<2x128xf32>
    %273 = vector.extract_strided_slice %272 {offsets = [0, 0], sizes = [2, 32], strides = [1, 1]} : vector<2x128xf32> to vector<2x32xf32>
    %274 = arith.negf %273 : vector<2x32xf32>
    %275 = math.exp %274 : vector<2x32xf32>
    %cst_40 = arith.constant 1.000000e+00 : f32
    %276 = vector.broadcast %cst_40 : f32 to vector<2x32xf32>
    %277 = arith.addf %276, %275 : vector<2x32xf32>
    %278 = arith.divf %276, %277 : vector<2x32xf32>
    %279 = vector.extract_strided_slice %272 {offsets = [0, 32], sizes = [2, 32], strides = [1, 1]} : vector<2x128xf32> to vector<2x32xf32>
    %280 = arith.negf %279 : vector<2x32xf32>
    %281 = math.exp %280 : vector<2x32xf32>
    %cst_41 = arith.constant 1.000000e+00 : f32
    %282 = vector.broadcast %cst_41 : f32 to vector<2x32xf32>
    %283 = arith.addf %282, %281 : vector<2x32xf32>
    %284 = arith.divf %282, %283 : vector<2x32xf32>
    %285 = vector.extract_strided_slice %272 {offsets = [0, 64], sizes = [2, 32], strides = [1, 1]} : vector<2x128xf32> to vector<2x32xf32>
    %286 = math.tanh %285 : vector<2x32xf32>
    %287 = vector.extract_strided_slice %272 {offsets = [0, 96], sizes = [2, 32], strides = [1, 1]} : vector<2x128xf32> to vector<2x32xf32>
    %288 = arith.negf %287 : vector<2x32xf32>
    %289 = math.exp %288 : vector<2x32xf32>
    %cst_42 = arith.constant 1.000000e+00 : f32
    %290 = vector.broadcast %cst_42 : f32 to vector<2x32xf32>
    %291 = arith.addf %290, %289 : vector<2x32xf32>
    %292 = arith.divf %290, %291 : vector<2x32xf32>
    %293 = arith.mulf %284, %268 : vector<2x32xf32>
    %294 = arith.mulf %278, %286 : vector<2x32xf32>
    %295 = arith.addf %293, %294 : vector<2x32xf32>
    %296 = math.tanh %295 : vector<2x32xf32>
    %297 = arith.mulf %292, %296 : vector<2x32xf32>
    %c7_i32 = arith.constant 7 : i32
    %298 = vector.broadcast %c7_i32 : i32 to vector<2x1xi32>
    %299 = arith.cmpi sgt, %6, %298 : vector<2x1xi32>
    %300 = vector.shape_cast %299 : vector<2x1xi1> to vector<2x1xi1>
    %301 = vector.broadcast %300 : vector<2x1xi1> to vector<2x32xi1>
    %302 = arith.select %301, %297, %265 : vector<2x32xi1>, vector<2x32xf32>
    %c0_43 = arith.constant 0 : index
    %c0_44 = arith.constant 0 : index
    %303 = vector.load %arg6[%c0_43, %c0_44] : memref<2x32xf32, #tpu.memory_space<vmem>>, vector<2x32xf32>
    tpu.vector_store %arg6[%c0_43, %c0_44], %302 {strides = array<i32>} : memref<2x32xf32, #tpu.memory_space<vmem>>, vector<2x32xf32>,
    return
  }
  func.func @transform_0(%arg0: i32) -> (i32, i32) {
    %c0_i32 = arith.constant 0 : i32
    %c0_i32_0 = arith.constant 0 : i32
    %c0_i32_1 = arith.constant 0 : i32
    return %c0_i32, %c0_i32_0 : i32, i32
  }
  func.func @transform_1(%arg0: i32) -> (i32, i32) {
    %c0_i32 = arith.constant 0 : i32
    %c0_i32_0 = arith.constant 0 : i32
    %c0_i32_1 = arith.constant 0 : i32
    return %c0_i32, %c0_i32_0 : i32, i32
  }
  func.func @transform_2(%arg0: i32) -> (i32, i32) {
    %c0_i32 = arith.constant 0 : i32
    %c0_i32_0 = arith.constant 0 : i32
    %c0_i32_1 = arith.constant 0 : i32
    return %c0_i32, %c0_i32_0 : i32, i32
  }
  func.func @transform_3(%arg0: i32) -> (i32, i32) {
    %c0_i32 = arith.constant 0 : i32
    %c0_i32_0 = arith.constant 0 : i32
    %c0_i32_1 = arith.constant 0 : i32
    return %c0_i32, %c0_i32_0 : i32, i32
  }
  func.func @transform_4(%arg0: i32) -> (i32, i32) {
    %c0_i32 = arith.constant 0 : i32
    %c0_i32_0 = arith.constant 0 : i32
    %c0_i32_1 = arith.constant 0 : i32
    return %c0_i32, %c0_i32_0 : i32, i32
  }
  func.func @transform_5(%arg0: i32) -> (i32, i32) {
    %c0_i32 = arith.constant 0 : i32
    %c0_i32_0 = arith.constant 0 : i32
    %c0_i32_1 = arith.constant 0 : i32
    return %c0_i32, %c0_i32_0 : i32, i32
  }
}

</mosaic_0001>

<llo_original>
// kernel: tpu_custom_call.1
$region0: #{tpu_custom_call.1}
  #allocation0 [shape = 'u32[]', space=smem, size = 0x4, offset = 0x4, fixed_abs, tag = 'smem constant byte address 0x4 - core index']
  #allocation1 [shape = 'u32[144,128]{1,0:T(1,128)}', space=vmem, size = 0x12000, scoped, tag = 'internal scratch']
  %s0 = inlined_call_operand.hbm [shape: bf16[16,16], index: 0, kind: input, shape index: {}]
  %s1 = inlined_call_operand.vmem [shape: s32[2,1], index: 1, kind: input, shape index: {}]
  %s2 = inlined_call_operand.vmem [shape: bf16[16,128], index: 2, kind: input, shape index: {}]
  %s3 = inlined_call_operand.hbm [shape: bf16[32,128], index: 3, kind: input, shape index: {}]
  %s4 = inlined_call_operand.vmem [shape: f32[1,128], index: 4, kind: input, shape index: {}]
  %s5 = inlined_call_operand.hbm [shape: f32[2,32], index: 5, kind: output, shape index: {}]
  %s6 = sld [smem:[#allocation0]]
  $region38: #{tpu_custom_call.1} parent=0
    _
  %s8 = ssub.s32 1, %s6
  %s9 = scalar_select 0, %s8, %s6
  $region1: #{tpu_custom_call.1} parent=0
    #allocation2 [shape = 'u8[4096]{0}', space=vmem, size = 0x1000, scoped, tag = 'input window, operand 0, single buffered']
    #allocation3 [shape = 's32[1]{0}', space=sflag, size = 0x4, scoped, tag = 'scoped memory for tpu_custom_call.1']
    #allocation4 [shape = 's32[1]{0}', space=sflag, size = 0x4, scoped, tag = 'scoped memory for tpu_custom_call.1']
    #allocation5 [shape = 'u8[8192]{0}', space=vmem, size = 0x2000, scoped, tag = 'input window, operand 3, single buffered']
    #allocation6 [shape = 's32[1]{0}', space=sflag, size = 0x4, scoped, tag = 'scoped memory for tpu_custom_call.1']
    #allocation7 [shape = 'u8[1024]{0}', space=vmem, size = 0x400, scoped, tag = 'output window, operand 0, single buffered']
    %10 = vsyncpa [#allocation3], 0
    %11 = vsyncpa [#allocation6], 0
    %12 = vsyncpa [#allocation4], 0
    // Predicated region
    $region2: #{tpu_custom_call.1} parent=1 // pred_check
      _
    $region3: #{tpu_custom_call.1} parent=1 // pred_check_branch
      %14 = sbr.rel (0) target = $region5
    $region4: #{tpu_custom_call.1} parent=1 // pred_region
      %s16 = ssub.s32 128, 128
      %17 = vsyncadd [#allocation3], %s16
      %s18 = sshll.u32 [#allocation2], 4
      %s19 = int_to_ptr.vmem [resolvable:$true] %s18
      %24 = dma.hbm_to_vmem [thread:$0]  %s0, 128, %s19, [#allocation3], 64, 64, 4
    $region5: #{tpu_custom_call.1} parent=1 // pred_fallthru
      _
    // Predicated region
    $region6: #{tpu_custom_call.1} parent=1 // pred_check
      _
    $region7: #{tpu_custom_call.1} parent=1 // pred_check_branch
      %26 = sbr.rel (0) target = $region9
    $region8: #{tpu_custom_call.1} parent=1 // pred_region
      _
    $region9: #{tpu_custom_call.1} parent=1 // pred_fallthru
      _
    // Predicated region
    $region10: #{tpu_custom_call.1} parent=1 // pred_check
      _
    $region11: #{tpu_custom_call.1} parent=1 // pred_check_branch
      %28 = sbr.rel (0) target = $region13
    $region12: #{tpu_custom_call.1} parent=1 // pred_region
      _
    $region13: #{tpu_custom_call.1} parent=1 // pred_fallthru
      _
    // Predicated region
    $region14: #{tpu_custom_call.1} parent=1 // pred_check
      _
    $region15: #{tpu_custom_call.1} parent=1 // pred_check_branch
      %30 = sbr.rel (0) target = $region17
    $region16: #{tpu_custom_call.1} parent=1 // pred_region
      %s32 = ssub.s32 256, 256
      %33 = vsyncadd [#allocation6], %s32
      %s34 = sshll.u32 [#allocation5], 4
      %s35 = int_to_ptr.vmem [resolvable:$true] %s34
      %40 = dma.hbm_to_vmem [thread:$0]  %s3, 256, %s35, [#allocation6], 64, 64, 4
    $region17: #{tpu_custom_call.1} parent=1 // pred_fallthru
      _
    // Predicated region
    $region18: #{tpu_custom_call.1} parent=1 // pred_check
      _
    $region19: #{tpu_custom_call.1} parent=1 // pred_check_branch
      %42 = sbr.rel (0) target = $region21
    $region20: #{tpu_custom_call.1} parent=1 // pred_region
      _
    $region21: #{tpu_custom_call.1} parent=1 // pred_fallthru
      _
    // Predicated region
    $region22: #{tpu_custom_call.1} parent=1 // pred_check
      _
    $region23: #{tpu_custom_call.1} parent=1 // pred_check_branch
      %44 = sbr.rel (0) target = $region25
    $region24: #{tpu_custom_call.1} parent=1 // pred_region
      %45 = dma.done [#allocation3], 128
    $region25: #{tpu_custom_call.1} parent=1 // pred_fallthru
      _
    // Predicated region
    $region26: #{tpu_custom_call.1} parent=1 // pred_check
      _
    $region27: #{tpu_custom_call.1} parent=1 // pred_check_branch
      %47 = sbr.rel (0) target = $region29
    $region28: #{tpu_custom_call.1} parent=1 // pred_region
      %48 = dma.done [#allocation6], 256
    $region29: #{tpu_custom_call.1} parent=1 // pred_fallthru
      _
    %v50 = vld [vmem:[#allocation2] sm:$0xf]
    %v51 = vld [vmem:[#allocation2 + $0x4] sm:$0xf]
    %v52 = vld [vmem:[%s2] sm:$0xf]
    %v53 = vld [vmem:[%s2 + $0x4] sm:$0xf]
    %v54 = vld [vmem:[%s4] sm:$0x1]
    %v56 = vlaneseq
    %v57 = vshrl.u32 %v56, 7
    %v58 = vsub.s32 0, %v57
    %v59 = vrot.slane %v54, %v58
    %v63 = vunpack.c.l.b16 %v50
    %v64 = vunpack.c.l.b16 %v51
    %v65 = vpack.c.b16 %v64, %v63
    %v68 = vunpack.c.l.b16 %v52
    %v69 = vunpack.c.l.b16 %v53
    %v70 = vpack.c.b16 %v69, %v68
    %vm72 = vcmask 130048
    %v74 = vsel %vm72, %v65, 0
    %76 = vmatprep.subr.bf16.mxu0 0
    %77 = vmatpush1.bf16.msra.mxu0 %v70
    %78 = vmatprep.subr.bf16.mxu0 0
    %79 = vmatpush1.bf16.msra.mxu0 0
    %80 = vmatprep.subr.bf16.mxu0 0
    %81 = vmatpush1.bf16.msra.mxu0 0
    %82 = vmatprep.subr.bf16.mxu0 0
    %83 = vmatpush1.bf16.msra.mxu0 0
    %84 = vmatprep.subr.bf16.mxu0 0
    %85 = vmatpush1.bf16.msra.mxu0 0
    %86 = vmatprep.subr.bf16.mxu0 0
    %87 = vmatpush1.bf16.msra.mxu0 0
    %88 = vmatprep.subr.bf16.mxu0 0
    %89 = vmatpush1.bf16.msra.mxu0 0
    %90 = vmatprep.subr.bf16.mxu0 0
    %91 = vmatpush1.bf16.msra.mxu0 0
    %92 = vmatprep.subr.bf16.mxu0 0
    %93 = vmatpush1.bf16.msra.mxu0 0
    %94 = vmatprep.subr.bf16.mxu0 0
    %95 = vmatpush1.bf16.msra.mxu0 0
    %96 = vmatprep.subr.bf16.mxu0 0
    %97 = vmatpush1.bf16.msra.mxu0 0
    %98 = vmatprep.subr.bf16.mxu0 0
    %99 = vmatpush1.bf16.msra.mxu0 0
    %100 = vmatprep.subr.bf16.mxu0 0
    %101 = vmatpush1.bf16.msra.mxu0 0
    %102 = vmatprep.subr.bf16.mxu0 0
    %103 = vmatpush1.bf16.msra.mxu0 0
    %104 = vmatprep.subr.bf16.mxu0 0
    %105 = vmatpush1.bf16.msra.mxu0 0
    %106 = vmatprep.subr.bf16.mxu0 0
    %107 = vmatpush1.bf16.msra.mxu0 0
    %108 = vmatprep.mubr.bf16.mxu0 0
    %109 = vmatmul.mubr.bf16.gmra.mrb[0].mxu0 %v74
    %v110 = vpop.f32.mrb[0].mxu0
    %v111 = vadd.f32 %v59, %v110
    %v112 = vpop.f32.mrb[0].mxu0
    %v113 = vpop.f32.mrb[0].mxu0
    %v114 = vadd.f32 %v59, %v113
    %v115 = vpop.f32.mrb[0].mxu0
    %116 = vdwg.mxu0
    %v117 = vld [vmem:[%s1] sm:$0x3]
    %v118 = vld [vmem:[#allocation5] sm:$0xf]
    %v119 = vld [vmem:[#allocation5 + $0x4] sm:$0xf]
    %v120 = vld [vmem:[#allocation5 + $0x8] sm:$0xf]
    %v121 = vld [vmem:[#allocation5 + $0xc] sm:$0xf]
    %v126 = vunpack.c.l.b16 %v118
    %v127 = vunpack.c.l.b16 %v119
    %v128 = vunpack.c.l.b16 %v120
    %v129 = vunpack.c.l.b16 %v121
    %v130 = vpack.c.b16 %v127, %v126
    %v131 = vpack.c.b16 %v129, %v128
    %vm134 = vcmask 261120
    %v136 = vsel %vm134, 0, 0
    %138 = vmatprep.subr.bf16.mxu0 0
    %139 = vmatpush1.bf16.msra.mxu0 %v130
    %140 = vmatprep.subr.bf16.mxu0 0
    %141 = vmatpush1.bf16.msra.mxu0 %v131
    %142 = vmatprep.subr.bf16.mxu0 0
    %143 = vmatpush1.bf16.msra.mxu0 0
    %144 = vmatprep.subr.bf16.mxu0 0
    %145 = vmatpush1.bf16.msra.mxu0 0
    %146 = vmatprep.subr.bf16.mxu0 0
    %147 = vmatpush1.bf16.msra.mxu0 0
    %148 = vmatprep.subr.bf16.mxu0 0
    %149 = vmatpush1.bf16.msra.mxu0 0
    %150 = vmatprep.subr.bf16.mxu0 0
    %151 = vmatpush1.bf16.msra.mxu0 0
    %152 = vmatprep.subr.bf16.mxu0 0
    %153 = vmatpush1.bf16.msra.mxu0 0
    %154 = vmatprep.subr.bf16.mxu0 0
    %155 = vmatpush1.bf16.msra.mxu0 0
    %156 = vmatprep.subr.bf16.mxu0 0
    %157 = vmatpush1.bf16.msra.mxu0 0
    %158 = vmatprep.subr.bf16.mxu0 0
    %159 = vmatpush1.bf16.msra.mxu0 0
    %160 = vmatprep.subr.bf16.mxu0 0
    %161 = vmatpush1.bf16.msra.mxu0 0
    %162 = vmatprep.subr.bf16.mxu0 0
    %163 = vmatpush1.bf16.msra.mxu0 0
    %164 = vmatprep.subr.bf16.mxu0 0
    %165 = vmatpush1.bf16.msra.mxu0 0
    %166 = vmatprep.subr.bf16.mxu0 0
    %167 = vmatpush1.bf16.msra.mxu0 0
    %168 = vmatprep.subr.bf16.mxu0 0
    %169 = vmatpush1.bf16.msra.mxu0 0
    %170 = vmatprep.mubr.bf16.mxu0 0
    %171 = vmatmul.mubr.bf16.gmra.mrb[0].mxu0 %v136
    %v172 = vpop.f32.mrb[0].mxu0
    %v173 = vadd.f32 0.0, %v172
    %v174 = vpop.f32.mrb[0].mxu0
    %v175 = vpop.f32.mrb[0].mxu0
    %v176 = vpop.f32.mrb[0].mxu0
    %177 = vdwg.mxu0
    %v178 = vadd.f32 %v111, %v173
    %v179 = vxor.u32 %v178, 2147483648
    %v180 = vmul.f32 %v179, 1.442695
    %v181 = vpow.pop %v180
    %v182 = vadd.f32 %v181, 1.0
    %v183 = vrcp.pop %v182
    %v184 = vmul.f32 1.0, %v183
    %v185 = vtanh.pop %v178
    %v186 = vmul.f32 %v184, 0.0
    %188 = vrot.lane.b32.xlu0 %v185, 64
    %v189 = vpop.permute.xlu0 %188
    %v191 = vmul.f32 %v184, %v189
    %193 = vrot.lane.b32.xlu0 %v191, 32
    %v194 = vpop.permute.xlu0 %193
    %v196 = vadd.f32 %v186, %v194
    %v197 = vtanh.pop %v196
    %199 = vrot.lane.b32.xlu0 %v197, 64
    %v200 = vpop.permute.xlu0 %199
    %v202 = vmul.f32 %v184, %v200
    %vm203 = vcmp.gt.s32.totalorder %v117, 0
    %v204 = vsel %vm203, 1, 0
    %205 = vset.pattern.permute.xlu0 0
    %206 = vperm.xlu0 %205, %v204
    %v207 = vpop.permute.xlu0 %206
    %vm208 = vcmp.eq.s32.totalorder %v207, 1
    %v209 = vsel %vm208, %v202, 0.0
    %v210 = vsel %vm208, %v196, 0.0
    %v211 = vpack.c.bf16 %v209, %v209
    %213 = vrot.lane.b32.xlu0 %v211, 32
    %v214 = vpop.permute.xlu0 %213
    %v216 = vsel %vm134, %v214, 0
    %218 = vmatprep.subr.bf16.mxu0 0
    %219 = vmatpush1.bf16.msra.mxu0 %v130
    %220 = vmatprep.subr.bf16.mxu0 0
    %221 = vmatpush1.bf16.msra.mxu0 %v131
    %222 = vmatprep.subr.bf16.mxu0 0
    %223 = vmatpush1.bf16.msra.mxu0 0
    %224 = vmatprep.subr.bf16.mxu0 0
    %225 = vmatpush1.bf16.msra.mxu0 0
    %226 = vmatprep.subr.bf16.mxu0 0
    %227 = vmatpush1.bf16.msra.mxu0 0
    %228 = vmatprep.subr.bf16.mxu0 0
    %229 = vmatpush1.bf16.msra.mxu0 0
    %230 = vmatprep.subr.bf16.mxu0 0
    %231 = vmatpush1.bf16.msra.mxu0 0
    %232 = vmatprep.subr.bf16.mxu0 0
    %233 = vmatpush1.bf16.msra.mxu0 0
    %234 = vmatprep.subr.bf16.mxu0 0
    %235 = vmatpush1.bf16.msra.mxu0 0
    %236 = vmatprep.subr.bf16.mxu0 0
    %237 = vmatpush1.bf16.msra.mxu0 0
    %238 = vmatprep.subr.bf16.mxu0 0
    %239 = vmatpush1.bf16.msra.mxu0 0
    %240 = vmatprep.subr.bf16.mxu0 0
    %241 = vmatpush1.bf16.msra.mxu0 0
    %242 = vmatprep.subr.bf16.mxu0 0
    %243 = vmatpush1.bf16.msra.mxu0 0
    %244 = vmatprep.subr.bf16.mxu0 0
    %245 = vmatpush1.bf16.msra.mxu0 0
    %246 = vmatprep.subr.bf16.mxu0 0
    %247 = vmatpush1.bf16.msra.mxu0 0
    %248 = vmatprep.subr.bf16.mxu0 0
    %249 = vmatpush1.bf16.msra.mxu0 0
    %250 = vmatprep.mubr.bf16.mxu0 0
    %251 = vmatmul.mubr.bf16.gmra.mrb[0].mxu0 %v216
    %v252 = vpop.f32.mrb[0].mxu0
    %v253 = vadd.f32 0.0, %v252
    %v254 = vpop.f32.mrb[0].mxu0
    %v255 = vpop.f32.mrb[0].mxu0
    %v256 = vpop.f32.mrb[0].mxu0
    %257 = vdwg.mxu0
    %v259 = vrot.slane %v253, 6
    %v261 = vadd.f32 %v111, %v259
    %v262 = vxor.u32 %v261, 2147483648
    %v263 = vmul.f32 %v262, 1.442695
    %v264 = vpow.pop %v263
    %v265 = vadd.f32 %v264, 1.0
    %v266 = vrcp.pop %v265
    %v267 = vmul.f32 1.0, %v266
    %v268 = vtanh.pop %v261
    %v270 = vrot.slane %v210, 6
    %v272 = vmul.f32 %v267, %v270
    %274 = vrot.lane.b32.xlu0 %v268, 64
    %v275 = vpop.permute.xlu0 %274
    %v277 = vmul.f32 %v267, %v275
    %279 = vrot.lane.b32.xlu0 %v277, 32
    %v280 = vpop.permute.xlu0 %279
    %v282 = vadd.f32 %v272, %v280
    %v283 = vtanh.pop %v282
    %285 = vrot.lane.b32.xlu0 %v283, 64
    %v286 = vpop.permute.xlu0 %285
    %v288 = vmul.f32 %v267, %v286
    %vm289 = vcmp.gt.s32.totalorder %v117, 1
    %v290 = vsel %vm289, 1, 0
    %291 = vset.pattern.permute.xlu0 0
    %292 = vperm.xlu0 %291, %v290
    %v293 = vpop.permute.xlu0 %292
    %vm294 = vcmp.eq.s32.totalorder %v293, 1
    %v296 = vrot.slane %v288, 2
    %297 = vrot.lane.b32.xlu0 %v296, 32
    %v298 = vpop.permute.xlu0 %297
    %301 = vrot.lane.b32.xlu0 %v209, 32
    %v302 = vpop.permute.xlu0 %301
    %v304 = vsel %vm294, %v298, %v302
    %v306 = vrot.slane %v282, 2
    %307 = vrot.lane.b32.xlu0 %v306, 96
    %v308 = vpop.permute.xlu0 %307
    %310 = vrot.lane.b32.xlu0 %v210, 96
    %v311 = vpop.permute.xlu0 %310
    %v313 = vsel %vm294, %v308, %v311
    %v314 = vpack.c.bf16 %v304, %v304
    %v316 = vsel %vm134, %v314, 0
    %318 = vmatprep.subr.bf16.mxu0 0
    %319 = vmatpush1.bf16.msra.mxu0 %v130
    %320 = vmatprep.subr.bf16.mxu0 0
    %321 = vmatpush1.bf16.msra.mxu0 %v131
    %322 = vmatprep.subr.bf16.mxu0 0
    %323 = vmatpush1.bf16.msra.mxu0 0
    %324 = vmatprep.subr.bf16.mxu0 0
    %325 = vmatpush1.bf16.msra.mxu0 0
    %326 = vmatprep.subr.bf16.mxu0 0
    %327 = vmatpush1.bf16.msra.mxu0 0
    %328 = vmatprep.subr.bf16.mxu0 0
    %329 = vmatpush1.bf16.msra.mxu0 0
    %330 = vmatprep.subr.bf16.mxu0 0
    %331 = vmatpush1.bf16.msra.mxu0 0
    %332 = vmatprep.subr.bf16.mxu0 0
    %333 = vmatpush1.bf16.msra.mxu0 0
    %334 = vmatprep.subr.bf16.mxu0 0
    %335 = vmatpush1.bf16.msra.mxu0 0
    %336 = vmatprep.subr.bf16.mxu0 0
    %337 = vmatpush1.bf16.msra.mxu0 0
    %338 = vmatprep.subr.bf16.mxu0 0
    %339 = vmatpush1.bf16.msra.mxu0 0
    %340 = vmatprep.subr.bf16.mxu0 0
    %341 = vmatpush1.bf16.msra.mxu0 0
    %342 = vmatprep.subr.bf16.mxu0 0
    %343 = vmatpush1.bf16.msra.mxu0 0
    %344 = vmatprep.subr.bf16.mxu0 0
    %345 = vmatpush1.bf16.msra.mxu0 0
    %346 = vmatprep.subr.bf16.mxu0 0
    %347 = vmatpush1.bf16.msra.mxu0 0
    %348 = vmatprep.subr.bf16.mxu0 0
    %349 = vmatpush1.bf16.msra.mxu0 0
    %350 = vmatprep.mubr.bf16.mxu0 0
    %351 = vmatmul.mubr.bf16.gmra.mrb[0].mxu0 %v316
    %v352 = vpop.f32.mrb[0].mxu0
    %v353 = vadd.f32 0.0, %v352
    %v354 = vpop.f32.mrb[0].mxu0
    %v355 = vpop.f32.mrb[0].mxu0
    %v356 = vpop.f32.mrb[0].mxu0
    %357 = vdwg.mxu0
    %v359 = vrot.slane %v353, 4
    %v361 = vadd.f32 %v111, %v359
    %v362 = vxor.u32 %v361, 2147483648
    %v363 = vmul.f32 %v362, 1.442695
    %v364 = vpow.pop %v363
    %v365 = vadd.f32 %v364, 1.0
    %v366 = vrcp.pop %v365
    %v367 = vmul.f32 1.0, %v366
    %v368 = vtanh.pop %v361
    %v370 = vrot.slane %v313, 4
    %371 = vrot.lane.b32.xlu0 %v370, 32
    %v372 = vpop.permute.xlu0 %371
    %v374 = vmul.f32 %v367, %v372
    %376 = vrot.lane.b32.xlu0 %v368, 64
    %v377 = vpop.permute.xlu0 %376
    %v379 = vmul.f32 %v367, %v377
    %381 = vrot.lane.b32.xlu0 %v379, 32
    %v382 = vpop.permute.xlu0 %381
    %v384 = vadd.f32 %v374, %v382
    %v385 = vtanh.pop %v384
    %387 = vrot.lane.b32.xlu0 %v385, 64
    %v388 = vpop.permute.xlu0 %387
    %v390 = vmul.f32 %v367, %v388
    %vm391 = vcmp.gt.s32.totalorder %v117, 2
    %v392 = vsel %vm391, 1, 0
    %393 = vset.pattern.permute.xlu0 0
    %394 = vperm.xlu0 %393, %v392
    %v395 = vpop.permute.xlu0 %394
    %vm396 = vcmp.eq.s32.totalorder %v395, 1
    %v398 = vrot.slane %v390, 4
    %399 = vrot.lane.b32.xlu0 %v398, 32
    %v400 = vpop.permute.xlu0 %399
    %v402 = vsel %vm396, %v400, %v304
    %v404 = vrot.slane %v384, 4
    %405 = vrot.lane.b32.xlu0 %v404, 96
    %v406 = vpop.permute.xlu0 %405
    %v408 = vsel %vm396, %v406, %v313
    %v409 = vpack.c.bf16 %v402, %v402
    %v411 = vsel %vm134, %v409, 0
    %413 = vmatprep.subr.bf16.mxu0 0
    %414 = vmatpush1.bf16.msra.mxu0 %v130
    %415 = vmatprep.subr.bf16.mxu0 0
    %416 = vmatpush1.bf16.msra.mxu0 %v131
    %417 = vmatprep.subr.bf16.mxu0 0
    %418 = vmatpush1.bf16.msra.mxu0 0
    %419 = vmatprep.subr.bf16.mxu0 0
    %420 = vmatpush1.bf16.msra.mxu0 0
    %421 = vmatprep.subr.bf16.mxu0 0
    %422 = vmatpush1.bf16.msra.mxu0 0
    %423 = vmatprep.subr.bf16.mxu0 0
    %424 = vmatpush1.bf16.msra.mxu0 0
    %425 = vmatprep.subr.bf16.mxu0 0
    %426 = vmatpush1.bf16.msra.mxu0 0
    %427 = vmatprep.subr.bf16.mxu0 0
    %428 = vmatpush1.bf16.msra.mxu0 0
    %429 = vmatprep.subr.bf16.mxu0 0
    %430 = vmatpush1.bf16.msra.mxu0 0
    %431 = vmatprep.subr.bf16.mxu0 0
    %432 = vmatpush1.bf16.msra.mxu0 0
    %433 = vmatprep.subr.bf16.mxu0 0
    %434 = vmatpush1.bf16.msra.mxu0 0
    %435 = vmatprep.subr.bf16.mxu0 0
    %436 = vmatpush1.bf16.msra.mxu0 0
    %437 = vmatprep.subr.bf16.mxu0 0
    %438 = vmatpush1.bf16.msra.mxu0 0
    %439 = vmatprep.subr.bf16.mxu0 0
    %440 = vmatpush1.bf16.msra.mxu0 0
    %441 = vmatprep.subr.bf16.mxu0 0
    %442 = vmatpush1.bf16.msra.mxu0 0
    %443 = vmatprep.subr.bf16.mxu0 0
    %444 = vmatpush1.bf16.msra.mxu0 0
    %445 = vmatprep.mubr.bf16.mxu0 0
    %446 = vmatmul.mubr.bf16.gmra.mrb[0].mxu0 %v411
    %v447 = vpop.f32.mrb[0].mxu0
    %v448 = vadd.f32 0.0, %v447
    %v449 = vpop.f32.mrb[0].mxu0
    %v450 = vpop.f32.mrb[0].mxu0
    %v451 = vpop.f32.mrb[0].mxu0
    %452 = vdwg.mxu0
    %v454 = vrot.slane %v448, 2
    %v456 = vadd.f32 %v111, %v454
    %v457 = vxor.u32 %v456, 2147483648
    %v458 = vmul.f32 %v457, 1.442695
    %v459 = vpow.pop %v458
    %v460 = vadd.f32 %v459, 1.0
    %v461 = vrcp.pop %v460
    %v462 = vmul.f32 1.0, %v461
    %v463 = vtanh.pop %v456
    %v465 = vrot.slane %v408, 2
    %466 = vrot.lane.b32.xlu0 %v465, 32
    %v467 = vpop.permute.xlu0 %466
    %v469 = vmul.f32 %v462, %v467
    %471 = vrot.lane.b32.xlu0 %v463, 64
    %v472 = vpop.permute.xlu0 %471
    %v474 = vmul.f32 %v462, %v472
    %476 = vrot.lane.b32.xlu0 %v474, 32
    %v477 = vpop.permute.xlu0 %476
    %v479 = vadd.f32 %v469, %v477
    %v480 = vtanh.pop %v479
    %482 = vrot.lane.b32.xlu0 %v480, 64
    %v483 = vpop.permute.xlu0 %482
    %v485 = vmul.f32 %v462, %v483
    %vm486 = vcmp.gt.s32.totalorder %v117, 3
    %v487 = vsel %vm486, 1, 0
    %488 = vset.pattern.permute.xlu0 0
    %489 = vperm.xlu0 %488, %v487
    %v490 = vpop.permute.xlu0 %489
    %vm491 = vcmp.eq.s32.totalorder %v490, 1
    %v493 = vrot.slane %v485, 6
    %494 = vrot.lane.b32.xlu0 %v493, 32
    %v495 = vpop.permute.xlu0 %494
    %v497 = vsel %vm491, %v495, %v402
    %v499 = vrot.slane %v479, 6
    %500 = vrot.lane.b32.xlu0 %v499, 96
    %v501 = vpop.permute.xlu0 %500
    %v503 = vsel %vm491, %v501, %v408
    %v504 = vpack.c.bf16 %v497, %v497
    %v506 = vsel %vm134, %v504, 0
    %508 = vmatprep.subr.bf16.mxu0 0
    %509 = vmatpush1.bf16.msra.mxu0 %v130
    %510 = vmatprep.subr.bf16.mxu0 0
    %511 = vmatpush1.bf16.msra.mxu0 %v131
    %512 = vmatprep.subr.bf16.mxu0 0
    %513 = vmatpush1.bf16.msra.mxu0 0
    %514 = vmatprep.subr.bf16.mxu0 0
    %515 = vmatpush1.bf16.msra.mxu0 0
    %516 = vmatprep.subr.bf16.mxu0 0
    %517 = vmatpush1.bf16.msra.mxu0 0
    %518 = vmatprep.subr.bf16.mxu0 0
    %519 = vmatpush1.bf16.msra.mxu0 0
    %520 = vmatprep.subr.bf16.mxu0 0
    %521 = vmatpush1.bf16.msra.mxu0 0
    %522 = vmatprep.subr.bf16.mxu0 0
    %523 = vmatpush1.bf16.msra.mxu0 0
    %524 = vmatprep.subr.bf16.mxu0 0
    %525 = vmatpush1.bf16.msra.mxu0 0
    %526 = vmatprep.subr.bf16.mxu0 0
    %527 = vmatpush1.bf16.msra.mxu0 0
    %528 = vmatprep.subr.bf16.mxu0 0
    %529 = vmatpush1.bf16.msra.mxu0 0
    %530 = vmatprep.subr.bf16.mxu0 0
    %531 = vmatpush1.bf16.msra.mxu0 0
    %532 = vmatprep.subr.bf16.mxu0 0
    %533 = vmatpush1.bf16.msra.mxu0 0
    %534 = vmatprep.subr.bf16.mxu0 0
    %535 = vmatpush1.bf16.msra.mxu0 0
    %536 = vmatprep.subr.bf16.mxu0 0
    %537 = vmatpush1.bf16.msra.mxu0 0
    %538 = vmatprep.subr.bf16.mxu0 0
    %539 = vmatpush1.bf16.msra.mxu0 0
    %540 = vmatprep.mubr.bf16.mxu0 0
    %541 = vmatmul.mubr.bf16.gmra.mrb[0].mxu0 %v506
    %v542 = vpop.f32.mrb[0].mxu0
    %v543 = vadd.f32 0.0, %v542
    %v544 = vpop.f32.mrb[0].mxu0
    %v545 = vpop.f32.mrb[0].mxu0
    %v546 = vpop.f32.mrb[0].mxu0
    %547 = vdwg.mxu0
    %v548 = vadd.f32 %v114, %v543
    %v549 = vxor.u32 %v548, 2147483648
    %v550 = vmul.f32 %v549, 1.442695
    %v551 = vpow.pop %v550
    %v552 = vadd.f32 %v551, 1.0
    %v553 = vrcp.pop %v552
    %v554 = vmul.f32 1.0, %v553
    %v555 = vtanh.pop %v548
    %557 = vrot.lane.b32.xlu0 %v503, 32
    %v558 = vpop.permute.xlu0 %557
    %v560 = vmul.f32 %v554, %v558
    %562 = vrot.lane.b32.xlu0 %v555, 64
    %v563 = vpop.permute.xlu0 %562
    %v565 = vmul.f32 %v554, %v563
    %567 = vrot.lane.b32.xlu0 %v565, 32
    %v568 = vpop.permute.xlu0 %567
    %v570 = vadd.f32 %v560, %v568
    %v571 = vtanh.pop %v570
    %573 = vrot.lane.b32.xlu0 %v571, 64
    %v574 = vpop.permute.xlu0 %573
    %v576 = vmul.f32 %v554, %v574
    %vm577 = vcmp.gt.s32.totalorder %v117, 4
    %v578 = vsel %vm577, 1, 0
    %579 = vset.pattern.permute.xlu0 0
    %580 = vperm.xlu0 %579, %v578
    %v581 = vpop.permute.xlu0 %580
    %vm582 = vcmp.eq.s32.totalorder %v581, 1
    %584 = vrot.lane.b32.xlu0 %v497, 96
    %v585 = vpop.permute.xlu0 %584
    %v587 = vsel %vm582, %v576, %v585
    %v588 = vsel %vm582, %v570, %v558
    %v589 = vpack.c.bf16 %v587, %v587
    %591 = vrot.lane.b32.xlu0 %v589, 32
    %v592 = vpop.permute.xlu0 %591
    %v594 = vsel %vm134, %v592, 0
    %596 = vmatprep.subr.bf16.mxu0 0
    %597 = vmatpush1.bf16.msra.mxu0 %v130
    %598 = vmatprep.subr.bf16.mxu0 0
    %599 = vmatpush1.bf16.msra.mxu0 %v131
    %600 = vmatprep.subr.bf16.mxu0 0
    %601 = vmatpush1.bf16.msra.mxu0 0
    %602 = vmatprep.subr.bf16.mxu0 0
    %603 = vmatpush1.bf16.msra.mxu0 0
    %604 = vmatprep.subr.bf16.mxu0 0
    %605 = vmatpush1.bf16.msra.mxu0 0
    %606 = vmatprep.subr.bf16.mxu0 0
    %607 = vmatpush1.bf16.msra.mxu0 0
    %608 = vmatprep.subr.bf16.mxu0 0
    %609 = vmatpush1.bf16.msra.mxu0 0
    %610 = vmatprep.subr.bf16.mxu0 0
    %611 = vmatpush1.bf16.msra.mxu0 0
    %612 = vmatprep.subr.bf16.mxu0 0
    %613 = vmatpush1.bf16.msra.mxu0 0
    %614 = vmatprep.subr.bf16.mxu0 0
    %615 = vmatpush1.bf16.msra.mxu0 0
    %616 = vmatprep.subr.bf16.mxu0 0
    %617 = vmatpush1.bf16.msra.mxu0 0
    %618 = vmatprep.subr.bf16.mxu0 0
    %619 = vmatpush1.bf16.msra.mxu0 0
    %620 = vmatprep.subr.bf16.mxu0 0
    %621 = vmatpush1.bf16.msra.mxu0 0
    %622 = vmatprep.subr.bf16.mxu0 0
    %623 = vmatpush1.bf16.msra.mxu0 0
    %624 = vmatprep.subr.bf16.mxu0 0
    %625 = vmatpush1.bf16.msra.mxu0 0
    %626 = vmatprep.subr.bf16.mxu0 0
    %627 = vmatpush1.bf16.msra.mxu0 0
    %628 = vmatprep.mubr.bf16.mxu0 0
    %629 = vmatmul.mubr.bf16.gmra.mrb[0].mxu0 %v594
    %v630 = vpop.f32.mrb[0].mxu0
    %v631 = vadd.f32 0.0, %v630
    %v632 = vpop.f32.mrb[0].mxu0
    %v633 = vpop.f32.mrb[0].mxu0
    %v634 = vpop.f32.mrb[0].mxu0
    %635 = vdwg.mxu0
    %v637 = vrot.slane %v631, 6
    %v639 = vadd.f32 %v114, %v637
    %v640 = vxor.u32 %v639, 2147483648
    %v641 = vmul.f32 %v640, 1.442695
    %v642 = vpow.pop %v641
    %v643 = vadd.f32 %v642, 1.0
    %v644 = vrcp.pop %v643
    %v645 = vmul.f32 1.0, %v644
    %v646 = vtanh.pop %v639
    %v648 = vrot.slane %v588, 6
    %v650 = vmul.f32 %v645, %v648
    %652 = vrot.lane.b32.xlu0 %v646, 64
    %v653 = vpop.permute.xlu0 %652
    %v655 = vmul.f32 %v645, %v653
    %657 = vrot.lane.b32.xlu0 %v655, 32
    %v658 = vpop.permute.xlu0 %657
    %v660 = vadd.f32 %v650, %v658
    %v661 = vtanh.pop %v660
    %663 = vrot.lane.b32.xlu0 %v661, 64
    %v664 = vpop.permute.xlu0 %663
    %v666 = vmul.f32 %v645, %v664
    %vm667 = vcmp.gt.s32.totalorder %v117, 5
    %v668 = vsel %vm667, 1, 0
    %669 = vset.pattern.permute.xlu0 0
    %670 = vperm.xlu0 %669, %v668
    %v671 = vpop.permute.xlu0 %670
    %vm672 = vcmp.eq.s32.totalorder %v671, 1
    %v674 = vrot.slane %v666, 2
    %675 = vrot.lane.b32.xlu0 %v674, 32
    %v676 = vpop.permute.xlu0 %675
    %679 = vrot.lane.b32.xlu0 %v587, 32
    %v680 = vpop.permute.xlu0 %679
    %v682 = vsel %vm672, %v676, %v680
    %v684 = vrot.slane %v660, 2
    %685 = vrot.lane.b32.xlu0 %v684, 96
    %v686 = vpop.permute.xlu0 %685
    %688 = vrot.lane.b32.xlu0 %v588, 96
    %v689 = vpop.permute.xlu0 %688
    %v691 = vsel %vm672, %v686, %v689
    %v692 = vpack.c.bf16 %v682, %v682
    %v694 = vsel %vm134, %v692, 0
    %696 = vmatprep.subr.bf16.mxu0 0
    %697 = vmatpush1.bf16.msra.mxu0 %v130
    %698 = vmatprep.subr.bf16.mxu0 0
    %699 = vmatpush1.bf16.msra.mxu0 %v131
    %700 = vmatprep.subr.bf16.mxu0 0
    %701 = vmatpush1.bf16.msra.mxu0 0
    %702 = vmatprep.subr.bf16.mxu0 0
    %703 = vmatpush1.bf16.msra.mxu0 0
    %704 = vmatprep.subr.bf16.mxu0 0
    %705 = vmatpush1.bf16.msra.mxu0 0
    %706 = vmatprep.subr.bf16.mxu0 0
    %707 = vmatpush1.bf16.msra.mxu0 0
    %708 = vmatprep.subr.bf16.mxu0 0
    %709 = vmatpush1.bf16.msra.mxu0 0
    %710 = vmatprep.subr.bf16.mxu0 0
    %711 = vmatpush1.bf16.msra.mxu0 0
    %712 = vmatprep.subr.bf16.mxu0 0
    %713 = vmatpush1.bf16.msra.mxu0 0
    %714 = vmatprep.subr.bf16.mxu0 0
    %715 = vmatpush1.bf16.msra.mxu0 0
    %716 = vmatprep.subr.bf16.mxu0 0
    %717 = vmatpush1.bf16.msra.mxu0 0
    %718 = vmatprep.subr.bf16.mxu0 0
    %719 = vmatpush1.bf16.msra.mxu0 0
    %720 = vmatprep.subr.bf16.mxu0 0
    %721 = vmatpush1.bf16.msra.mxu0 0
    %722 = vmatprep.subr.bf16.mxu0 0
    %723 = vmatpush1.bf16.msra.mxu0 0
    %724 = vmatprep.subr.bf16.mxu0 0
    %725 = vmatpush1.bf16.msra.mxu0 0
    %726 = vmatprep.subr.bf16.mxu0 0
    %727 = vmatpush1.bf16.msra.mxu0 0
    %728 = vmatprep.mubr.bf16.mxu0 0
    %729 = vmatmul.mubr.bf16.gmra.mrb[0].mxu0 %v694
    %v730 = vpop.f32.mrb[0].mxu0
    %v731 = vadd.f32 0.0, %v730
    %v732 = vpop.f32.mrb[0].mxu0
    %v733 = vpop.f32.mrb[0].mxu0
    %v734 = vpop.f32.mrb[0].mxu0
    %735 = vdwg.mxu0
    %v737 = vrot.slane %v731, 4
    %v739 = vadd.f32 %v114, %v737
    %v740 = vxor.u32 %v739, 2147483648
    %v741 = vmul.f32 %v740, 1.442695
    %v742 = vpow.pop %v741
    %v743 = vadd.f32 %v742, 1.0
    %v744 = vrcp.pop %v743
    %v745 = vmul.f32 1.0, %v744
    %v746 = vtanh.pop %v739
    %v748 = vrot.slane %v691, 4
    %749 = vrot.lane.b32.xlu0 %v748, 32
    %v750 = vpop.permute.xlu0 %749
    %v752 = vmul.f32 %v745, %v750
    %754 = vrot.lane.b32.xlu0 %v746, 64
    %v755 = vpop.permute.xlu0 %754
    %v757 = vmul.f32 %v745, %v755
    %759 = vrot.lane.b32.xlu0 %v757, 32
    %v760 = vpop.permute.xlu0 %759
    %v762 = vadd.f32 %v752, %v760
    %v763 = vtanh.pop %v762
    %765 = vrot.lane.b32.xlu0 %v763, 64
    %v766 = vpop.permute.xlu0 %765
    %v768 = vmul.f32 %v745, %v766
    %vm769 = vcmp.gt.s32.totalorder %v117, 6
    %v770 = vsel %vm769, 1, 0
    %771 = vset.pattern.permute.xlu0 0
    %772 = vperm.xlu0 %771, %v770
    %v773 = vpop.permute.xlu0 %772
    %vm774 = vcmp.eq.s32.totalorder %v773, 1
    %v776 = vrot.slane %v768, 4
    %777 = vrot.lane.b32.xlu0 %v776, 32
    %v778 = vpop.permute.xlu0 %777
    %v780 = vsel %vm774, %v778, %v682
    %v782 = vrot.slane %v762, 4
    %783 = vrot.lane.b32.xlu0 %v782, 96
    %v784 = vpop.permute.xlu0 %783
    %v786 = vsel %vm774, %v784, %v691
    %v787 = vpack.c.bf16 %v780, %v780
    %v789 = vsel %vm134, %v787, 0
    %791 = vmatprep.subr.bf16.mxu0 0
    %792 = vmatpush1.bf16.msra.mxu0 %v130
    %793 = vmatprep.subr.bf16.mxu0 0
    %794 = vmatpush1.bf16.msra.mxu0 %v131
    %795 = vmatprep.subr.bf16.mxu0 0
    %796 = vmatpush1.bf16.msra.mxu0 0
    %797 = vmatprep.subr.bf16.mxu0 0
    %798 = vmatpush1.bf16.msra.mxu0 0
    %799 = vmatprep.subr.bf16.mxu0 0
    %800 = vmatpush1.bf16.msra.mxu0 0
    %801 = vmatprep.subr.bf16.mxu0 0
    %802 = vmatpush1.bf16.msra.mxu0 0
    %803 = vmatprep.subr.bf16.mxu0 0
    %804 = vmatpush1.bf16.msra.mxu0 0
    %805 = vmatprep.subr.bf16.mxu0 0
    %806 = vmatpush1.bf16.msra.mxu0 0
    %807 = vmatprep.subr.bf16.mxu0 0
    %808 = vmatpush1.bf16.msra.mxu0 0
    %809 = vmatprep.subr.bf16.mxu0 0
    %810 = vmatpush1.bf16.msra.mxu0 0
    %811 = vmatprep.subr.bf16.mxu0 0
    %812 = vmatpush1.bf16.msra.mxu0 0
    %813 = vmatprep.subr.bf16.mxu0 0
    %814 = vmatpush1.bf16.msra.mxu0 0
    %815 = vmatprep.subr.bf16.mxu0 0
    %816 = vmatpush1.bf16.msra.mxu0 0
    %817 = vmatprep.subr.bf16.mxu0 0
    %818 = vmatpush1.bf16.msra.mxu0 0
    %819 = vmatprep.subr.bf16.mxu0 0
    %820 = vmatpush1.bf16.msra.mxu0 0
    %821 = vmatprep.subr.bf16.mxu0 0
    %822 = vmatpush1.bf16.msra.mxu0 0
    %823 = vmatprep.mubr.bf16.mxu0 0
    %824 = vmatmul.mubr.bf16.gmra.mrb[0].mxu0 %v789
    %v825 = vpop.f32.mrb[0].mxu0
    %v826 = vadd.f32 0.0, %v825
    %v827 = vpop.f32.mrb[0].mxu0
    %v828 = vpop.f32.mrb[0].mxu0
    %v829 = vpop.f32.mrb[0].mxu0
    %830 = vdwg.mxu0
    %v832 = vrot.slane %v826, 2
    %v834 = vadd.f32 %v114, %v832
    %v835 = vxor.u32 %v834, 2147483648
    %v836 = vmul.f32 %v835, 1.442695
    %v837 = vpow.pop %v836
    %v838 = vadd.f32 %v837, 1.0
    %v839 = vrcp.pop %v838
    %v840 = vmul.f32 1.0, %v839
    %v841 = vtanh.pop %v834
    %v843 = vrot.slane %v786, 2
    %844 = vrot.lane.b32.xlu0 %v843, 32
    %v845 = vpop.permute.xlu0 %844
    %v847 = vmul.f32 %v840, %v845
    %849 = vrot.lane.b32.xlu0 %v841, 64
    %v850 = vpop.permute.xlu0 %849
    %v852 = vmul.f32 %v840, %v850
    %854 = vrot.lane.b32.xlu0 %v852, 32
    %v855 = vpop.permute.xlu0 %854
    %v857 = vadd.f32 %v847, %v855
    %v858 = vtanh.pop %v857
    %860 = vrot.lane.b32.xlu0 %v858, 64
    %v861 = vpop.permute.xlu0 %860
    %v863 = vmul.f32 %v840, %v861
    %vm864 = vcmp.gt.s32.totalorder %v117, 7
    %v865 = vsel %vm864, 1, 0
    %866 = vset.pattern.permute.xlu0 0
    %867 = vperm.xlu0 %866, %v865
    %v868 = vpop.permute.xlu0 %867
    %vm869 = vcmp.eq.s32.totalorder %v868, 1
    %v871 = vrot.slane %v863, 6
    %872 = vrot.lane.b32.xlu0 %v871, 32
    %v873 = vpop.permute.xlu0 %872
    %v875 = vsel %vm869, %v873, %v780
    %vm876 = vcmask 254976
    %877 = vst.msk [vmem:[#allocation7] sm:$0x3] %vm876, %v875
    // Predicated region
    $region30: #{tpu_custom_call.1} parent=1 // pred_check
      _
    $region31: #{tpu_custom_call.1} parent=1 // pred_check_branch
      %879 = sbr.rel (0) target = $region33
    $region32: #{tpu_custom_call.1} parent=1 // pred_region
      %s881 = ssub.s32 32, 32
      %882 = vsyncadd [#allocation4], %s881
      %s884 = sshll.u32 [#allocation7], 4
      %s885 = int_to_ptr.vmem [resolvable:$true] %s884
      %887 = dma.vmem_to_hbm [thread:$0]  %s885, 32, %s5, [#allocation4]
    $region33: #{tpu_custom_call.1} parent=1 // pred_fallthru
      _
    // Predicated region
    $region34: #{tpu_custom_call.1} parent=1 // pred_check
      _
    $region35: #{tpu_custom_call.1} parent=1 // pred_check_branch
      %889 = sbr.rel (0) target = $region37
    $region36: #{tpu_custom_call.1} parent=1 // pred_region
      %890 = dma.done [#allocation4], 32
    $region37: #{tpu_custom_call.1} parent=1 // pred_fallthru
      _
    %891 = vsyncpa [#allocation3], 1
    %892 = vsyncpa [#allocation6], 1
    %893 = vsyncpa [#allocation4], 1

</llo_original>
